<compile_context>
chip_gen: v7x
topology: tpu7x:2x2x1
jax: 0.10.0
libtpu: 0.0.40
codegen_flags: <defaults>
</compile_context>

<pallas_src>
import math

import jax
import jax.numpy as jnp
from jax.experimental import pallas as pl
from jax.experimental.pallas import tpu as pltpu


def data_embedding_kernel(x_ref, w_ref, pe_ref, o_ref):
    # x_ref: [bb, L, 3C]   w_ref: [3C, D]   pe_ref: [L, D] (f32)   o_ref: [bb, L, D]
    bb, L, K = x_ref.shape
    D = w_ref.shape[1]
    x2d = x_ref[...].reshape(bb * L, K)                  # merge leading dims -> big M
    y = jnp.dot(x2d, w_ref[...],
                preferred_element_type=jnp.float32)      # one M=bb*L, K=3C matmul
    y = y.reshape(bb, L, D) + pe_ref[...][None]          # broadcast PE over batch (f32)
    # TODO(synk): dropout(p=0.1) is identity in eval mode; training-mode dropout
    # (pltpu.prng_seed + pltpu.prng_random_bits masking) not implemented.
    o_ref[...] = y.astype(o_ref.dtype)                   # single lane-dense store


def _round_up(n, m):
    return (n + m - 1) // m * m


def _padded_tile_bytes(rows, cols, dtype):
    """VMEM bytes of a 2-D tile including (sublane, lane) padding."""
    itemsize = jnp.dtype(dtype).itemsize
    sublane = 8 * max(1, 4 // itemsize)      # 8 (f32), 16 (bf16), 32 (int8)
    return _round_up(rows, sublane) * _round_up(cols, 128) * itemsize


def _chip_config():
    """Returns (vmem_limit_bytes, block_budget_bytes, multi_tensorcore)."""
    vmem_cap = 64 << 20                      # conservative default (v7x per-TC VMEM)
    try:
        vmem_cap = int(pltpu.get_tpu_info().vmem_capacity_bytes)
    except Exception:
        pass
    kind = ""
    try:
        kind = jax.devices()[0].device_kind.lower()
    except Exception:
        pass
    # 2 TensorCores share the grid only on v7x (and megacore v4/v5p parts).
    multi_tc = any(tag in kind for tag in ("7x", "v7", "v4", "v5p"))
    vmem_limit = (vmem_cap * 3) // 4         # ~48 MiB on v7x, ~96 MiB on v5e/v6e
    block_budget = vmem_limit // 2           # headroom for resident w/pe + scratch
    return vmem_limit, block_budget, multi_tc


def _pick_batch_block(B, L, C, D, compute_dtype, out_dtype, block_budget, multi_tc):
    """Batches per grid step, sized from a padding-aware VMEM budget."""
    per_b = 2 * (_padded_tile_bytes(L, 3 * C, compute_dtype)   # double-buffered x_cat block
                 + _padded_tile_bytes(L, D, out_dtype))        # double-buffered out block
    resident = 2 * (_padded_tile_bytes(3 * C, D, compute_dtype)  # grid-invariant weights
                    + _padded_tile_bytes(L, D, jnp.float32))     # grid-invariant PE (f32)
    avail = max(per_b, block_budget - resident)
    bb = max(1, min(B, avail // per_b))
    if multi_tc and B >= 2:
        bb = min(bb, pl.cdiv(B, 2))          # keep both TensorCores busy (v7x)
    return bb


def data_embedding(x, conv_weight, pe, *, compute_dtype=None, out_dtype=None):
    """DataEmbedding.forward (eval mode).

    x: [B, L, C_in]; conv_weight: [d_model, C_in, 3] (PyTorch layout); pe: [pos, d_model].
    compute_dtype: dtype of matmul operands streamed to the kernel (bf16 halves HBM traffic);
    out_dtype: dtype of the [B, L, d_model] output (dominant HBM stream).  f32 accumulation.
    """
    B, L, C = x.shape
    D = conv_weight.shape[0]
    compute_dtype = jnp.dtype(x.dtype if compute_dtype is None else compute_dtype)
    out_dtype = compute_dtype if out_dtype is None else jnp.dtype(out_dtype)

    # Circular taps built in the wrapper (x stream is tiny vs the [B,L,D] output);
    # removes all in-kernel roll/concat XLU work.
    x_prev = jnp.roll(x, 1, axis=1)                               # x[(t-1) % L]
    x_next = jnp.roll(x, -1, axis=1)                              # x[(t+1) % L]
    x_cat = jnp.concatenate([x_prev, x, x_next], axis=-1).astype(compute_dtype)  # [B, L, 3C]

    # Fuse the 3 conv taps: PyTorch weight [D, C, 3] -> single [3C, D] matrix,
    # tap-major so rows [0:C) pair with x[t-1], [C:2C) with x[t], [2C:3C) with x[t+1].
    w_cat = jnp.transpose(conv_weight, (2, 1, 0)).reshape(3 * C, D).astype(compute_dtype)
    pe = pe[:L].astype(jnp.float32)          # PositionalEmbedding.forward slices to L

    vmem_limit, block_budget, multi_tc = _chip_config()
    bb = _pick_batch_block(B, L, C, D, compute_dtype, out_dtype, block_budget, multi_tc)
    grid = (pl.cdiv(B, bb),)                 # ragged last block handled by Pallas

    return pl.pallas_call(
        data_embedding_kernel,
        out_shape=jax.ShapeDtypeStruct((B, L, D), out_dtype),
        grid_spec=pltpu.PrefetchScalarGridSpec(
            num_scalar_prefetch=0,
            grid=grid,
            in_specs=[
                pl.BlockSpec((bb, L, 3 * C), lambda i: (i, 0, 0)),
                pl.BlockSpec((3 * C, D), lambda i: (0, 0)),   # grid-invariant weights
                pl.BlockSpec((L, D), lambda i: (0, 0)),       # grid-invariant PE
            ],
            out_specs=pl.BlockSpec((bb, L, D), lambda i: (i, 0, 0)),
        ),
        compiler_params=pltpu.CompilerParams(
            dimension_semantics=("parallel",),
            vmem_limit_bytes=vmem_limit,
        ),
    )(x_cat, w_cat, pe)


def make_positional_embedding(positions, d_model):
    """PositionalEmbedding buffer (matches the spec module, which uses log(1e6))."""
    pos = positions.astype(jnp.float32)[:, None]                  # [L, 1]
    idx = jnp.arange(0, d_model, 2, dtype=jnp.float32)            # [D/2]
    div_term = jnp.exp(idx * (-math.log(1000000.0) / d_model))    # [D/2]
    ang = pos * div_term                                          # [L, D/2]
    pe_buf = jnp.zeros((positions.shape[0], d_model), jnp.float32)
    pe_buf = pe_buf.at[:, 0::2].set(jnp.sin(ang))
    pe_buf = pe_buf.at[:, 1::2].set(jnp.cos(ang))
    return pe_buf


def make_token_conv_weight(key, c_in, d_model):
    """Kaiming normal (fan_in, leaky_relu slope=0.01) init of Conv1d weight [d_model, c_in, 3]."""
    fan_in = c_in * 3
    gain = math.sqrt(2.0 / (1.0 + 0.01 ** 2))
    std = gain / math.sqrt(fan_in)
    return std * jax.random.normal(key, (d_model, c_in, 3), jnp.float32)


def _reference(x, conv_weight, pe, compute_dtype):
    """Pure-JAX reference of DataEmbedding.forward (eval), dtype-matched to the kernel."""
    B, L, C = x.shape
    xc = x.astype(compute_dtype).astype(jnp.float32)
    w_cat = (jnp.transpose(conv_weight, (2, 1, 0)).reshape(3 * C, -1)
             .astype(compute_dtype).astype(jnp.float32))
    x_cat = jnp.concatenate(
        [jnp.roll(xc, 1, axis=1), xc, jnp.roll(xc, -1, axis=1)], axis=-1)   # [B, L, 3C]
    y = jnp.einsum("blk,kd->bld", x_cat, w_cat,
                   precision=jax.lax.Precision.HIGHEST)
    return y + pe[:L][None]


if __name__ == "__main__":
    # lane-dense d_model (multiple of 128); small shapes consistent with the module
    B, L, C_IN, D_MODEL = 4, 16, 4, 128

    key = jax.random.PRNGKey(0)
    k_x, k_w = jax.random.split(key)

    x = jax.random.normal(k_x, (B, L, C_IN), jnp.float32)
    conv_w = make_token_conv_weight(k_w, C_IN, D_MODEL)
    pe = make_positional_embedding(jnp.arange(L), D_MODEL)

    # bf16 operands + bf16 output (dominant HBM stream halved); f32 accumulation.
    out = data_embedding(x, conv_w, pe,
                         compute_dtype=jnp.bfloat16, out_dtype=jnp.bfloat16)
    out = jax.block_until_ready(out)

    assert out.shape == (B, L, D_MODEL), out.shape
    assert out.dtype == jnp.bfloat16, out.dtype
    ref = _reference(x, conv_w, pe, jnp.bfloat16)
    assert bool(jnp.allclose(out.astype(jnp.float32), ref, atol=3e-2, rtol=3e-2)), \
        "mismatch vs reference"
    print("KERNEL_OK")
</pallas_src>

<mosaic_0001>
module attributes {stable_mosaic.version = 11 : i64} {
  func.func @data_embedding_kernel(%arg0: i32, %arg1: memref<4x16x12xbf16, #tpu.memory_space<vmem>>, %arg2: memref<12x128xbf16, #tpu.memory_space<vmem>>, %arg3: memref<16x128xf32, #tpu.memory_space<vmem>>, %arg4: memref<4x16x128xbf16, #tpu.memory_space<vmem>>) attributes {dimension_semantics = [#tpu.dimension_semantics<parallel>], iteration_bounds = array<i64: 1>, scalar_prefetch = 0 : i64, scratch_operands = 0 : i64, tpu.core_type = #tpu.core_type<tc>, window_params = [{transform_indices = @transform_0, window_bounds = array<i64: 4, 16, 12>}, {pipeline_mode = #tpu.pipeline_mode<synchronous>, transform_indices = @transform_1, window_bounds = array<i64: 12, 128>}, {pipeline_mode = #tpu.pipeline_mode<synchronous>, transform_indices = @transform_2, window_bounds = array<i64: 16, 128>}, {transform_indices = @transform_3, window_bounds = array<i64: 4, 16, 128>}]} {
    %c0 = arith.constant 0 : index
    %c0_0 = arith.constant 0 : index
    %c0_1 = arith.constant 0 : index
    %0 = vector.load %arg1[%c0, %c0_0, %c0_1] : memref<4x16x12xbf16, #tpu.memory_space<vmem>>, vector<4x16x12xbf16>
    %1 = vector.shape_cast %0 : vector<4x16x12xbf16> to vector<64x12xbf16>
    %c0_2 = arith.constant 0 : index
    %c0_3 = arith.constant 0 : index
    %2 = vector.load %arg2[%c0_2, %c0_3] : memref<12x128xbf16, #tpu.memory_space<vmem>>, vector<12x128xbf16>
    %cst = arith.constant dense<0.000000e+00> : vector<64x128xf32>
    %3 = tpu.matmul %1, %2, %cst {dimension_numbers = #tpu.dot_dimension_numbers<[1], [0], [0], [1], [0, 0, 1, 1], [], []>} : vector<64x12xbf16>, vector<12x128xbf16>, vector<64x128xf32> -> vector<64x128xf32>
    %4 = vector.shape_cast %3 : vector<64x128xf32> to vector<4x16x128xf32>
    %c0_4 = arith.constant 0 : index
    %c0_5 = arith.constant 0 : index
    %5 = vector.load %arg3[%c0_4, %c0_5] : memref<16x128xf32, #tpu.memory_space<vmem>>, vector<16x128xf32>
    %6 = vector.shape_cast %5 : vector<16x128xf32> to vector<1x16x128xf32>
    %7 = vector.broadcast %6 : vector<1x16x128xf32> to vector<4x16x128xf32>
    %8 = arith.addf %4, %7 : vector<4x16x128xf32>
    %9 = arith.truncf %8 : vector<4x16x128xf32> to vector<4x16x128xbf16>
    %c0_6 = arith.constant 0 : index
    %c0_7 = arith.constant 0 : index
    %c0_8 = arith.constant 0 : index
    %10 = vector.load %arg4[%c0_6, %c0_7, %c0_8] : memref<4x16x128xbf16, #tpu.memory_space<vmem>>, vector<4x16x128xbf16>
    tpu.vector_store %arg4[%c0_6, %c0_7, %c0_8], %9 {strides = array<i32>} : memref<4x16x128xbf16, #tpu.memory_space<vmem>>, vector<4x16x128xbf16>,
    return
  }
  func.func @transform_0(%arg0: i32) -> (i32, i32, i32) {
    %c0_i32 = arith.constant 0 : i32
    %c0_i32_0 = arith.constant 0 : i32
    %c0_i32_1 = arith.constant 0 : i32
    return %arg0, %c0_i32, %c0_i32_0 : i32, i32, i32
  }
  func.func @transform_1(%arg0: i32) -> (i32, i32) {
    %c0_i32 = arith.constant 0 : i32
    %c0_i32_0 = arith.constant 0 : i32
    %c0_i32_1 = arith.constant 0 : i32
    return %c0_i32, %c0_i32_0 : i32, i32
  }
  func.func @transform_2(%arg0: i32) -> (i32, i32) {
    %c0_i32 = arith.constant 0 : i32
    %c0_i32_0 = arith.constant 0 : i32
    %c0_i32_1 = arith.constant 0 : i32
    return %c0_i32, %c0_i32_0 : i32, i32
  }
  func.func @transform_3(%arg0: i32) -> (i32, i32, i32) {
    %c0_i32 = arith.constant 0 : i32
    %c0_i32_0 = arith.constant 0 : i32
    %c0_i32_1 = arith.constant 0 : i32
    return %arg0, %c0_i32, %c0_i32_0 : i32, i32, i32
  }
}

</mosaic_0001>

<llo_original>
// kernel: tpu_custom_call.1
$region0: #{tpu_custom_call.1}
  #allocation0 [shape = 'u32[]', space=smem, size = 0x4, offset = 0x4, fixed_abs, tag = 'smem constant byte address 0x4 - core index']
  #allocation1 [shape = 'u32[144,128]{1,0:T(1,128)}', space=vmem, size = 0x12000, scoped, tag = 'internal scratch']
  %s0 = inlined_call_operand.vmem [shape: bf16[4,16,12], index: 0, kind: input, shape index: {}]
  %s1 = inlined_call_operand.vmem [shape: bf16[12,128], index: 1, kind: input, shape index: {}]
  %s2 = inlined_call_operand.vmem [shape: f32[16,128], index: 2, kind: input, shape index: {}]
  %s3 = inlined_call_operand.hbm [shape: bf16[4,16,128], index: 3, kind: output, shape index: {}]
  %s4 = sld [smem:[#allocation0]]
  $region22: #{tpu_custom_call.1} parent=0
    _
  %s6 = ssub.s32 1, %s4
  %s7 = scalar_select 0, %s6, %s4
  $region1: #{tpu_custom_call.1} parent=0
    #allocation2 [shape = 'u8[16384]{0}', space=vmem, size = 0x4000, scoped, tag = 'output window, operand 0, single buffered']
    #allocation3 [shape = 's32[1]{0}', space=sflag, size = 0x4, scoped, tag = 'scoped memory for tpu_custom_call.1']
    %8 = vsyncpa [#allocation3], 0
    // Predicated region
    $region2: #{tpu_custom_call.1} parent=1 // pred_check
      _
    $region3: #{tpu_custom_call.1} parent=1 // pred_check_branch
      %10 = sbr.rel (0) target = $region5
    $region4: #{tpu_custom_call.1} parent=1 // pred_region
      _
    $region5: #{tpu_custom_call.1} parent=1 // pred_fallthru
      _
    // Predicated region
    $region6: #{tpu_custom_call.1} parent=1 // pred_check
      _
    $region7: #{tpu_custom_call.1} parent=1 // pred_check_branch
      %12 = sbr.rel (0) target = $region9
    $region8: #{tpu_custom_call.1} parent=1 // pred_region
      _
    $region9: #{tpu_custom_call.1} parent=1 // pred_fallthru
      _
    // Predicated region
    $region10: #{tpu_custom_call.1} parent=1 // pred_check
      _
    $region11: #{tpu_custom_call.1} parent=1 // pred_check_branch
      %14 = sbr.rel (0) target = $region13
    $region12: #{tpu_custom_call.1} parent=1 // pred_region
      _
    $region13: #{tpu_custom_call.1} parent=1 // pred_fallthru
      _
    %v16 = vld [vmem:[%s0] sm:$0xf]
    %v17 = vld [vmem:[%s0 + $0x4] sm:$0xf]
    %v18 = vld [vmem:[%s0 + $0x8] sm:$0xf]
    %v19 = vld [vmem:[%s0 + $0xc] sm:$0xf]
    %v20 = vld [vmem:[%s0 + $0x10] sm:$0xf]
    %v21 = vld [vmem:[%s0 + $0x14] sm:$0xf]
    %v22 = vld [vmem:[%s0 + $0x18] sm:$0xf]
    %v23 = vld [vmem:[%s0 + $0x1c] sm:$0xf]
    %v24 = vld [vmem:[%s1] sm:$0xf]
    %v25 = vld [vmem:[%s1 + $0x4] sm:$0x3]
    %v34 = vunpack.c.l.b16 %v16
    %v35 = vunpack.c.l.b16 %v17
    %v36 = vunpack.c.l.b16 %v18
    %v37 = vunpack.c.l.b16 %v19
    %v38 = vunpack.c.l.b16 %v20
    %v39 = vunpack.c.l.b16 %v21
    %v40 = vunpack.c.l.b16 %v22
    %v41 = vunpack.c.l.b16 %v23
    %v42 = vpack.c.b16 %v35, %v34
    %v43 = vpack.c.b16 %v37, %v36
    %v44 = vpack.c.b16 %v39, %v38
    %v45 = vpack.c.b16 %v41, %v40
    %v48 = vunpack.c.l.b16 %v24
    %v49 = vunpack.c.l.b16 %v25
    %v50 = vpack.c.b16 %v49, %v48
    %vm51 = vcmask 97280
    %v53 = vsel %vm51, %v42, 0
    %v56 = vsel %vm51, %v43, 0
    %v59 = vsel %vm51, %v44, 0
    %v62 = vsel %vm51, %v45, 0
    %vm64 = vcmask 1045504
    %v66 = vsel %vm64, %v50, 0
    %68 = vmatprep.subr.bf16.mxu0 0
    %69 = vmatpush1.bf16.msra.mxu0 %v66
    %70 = vmatprep.subr.bf16.mxu0 0
    %71 = vmatpush1.bf16.msra.mxu0 0
    %72 = vmatprep.subr.bf16.mxu0 0
    %73 = vmatpush1.bf16.msra.mxu0 0
    %74 = vmatprep.subr.bf16.mxu0 0
    %75 = vmatpush1.bf16.msra.mxu0 0
    %76 = vmatprep.subr.bf16.mxu0 0
    %77 = vmatpush1.bf16.msra.mxu0 0
    %78 = vmatprep.subr.bf16.mxu0 0
    %79 = vmatpush1.bf16.msra.mxu0 0
    %80 = vmatprep.subr.bf16.mxu0 0
    %81 = vmatpush1.bf16.msra.mxu0 0
    %82 = vmatprep.subr.bf16.mxu0 0
    %83 = vmatpush1.bf16.msra.mxu0 0
    %84 = vmatprep.subr.bf16.mxu0 0
    %85 = vmatpush1.bf16.msra.mxu0 0
    %86 = vmatprep.subr.bf16.mxu0 0
    %87 = vmatpush1.bf16.msra.mxu0 0
    %88 = vmatprep.subr.bf16.mxu0 0
    %89 = vmatpush1.bf16.msra.mxu0 0
    %90 = vmatprep.subr.bf16.mxu0 0
    %91 = vmatpush1.bf16.msra.mxu0 0
    %92 = vmatprep.subr.bf16.mxu0 0
    %93 = vmatpush1.bf16.msra.mxu0 0
    %94 = vmatprep.subr.bf16.mxu0 0
    %95 = vmatpush1.bf16.msra.mxu0 0
    %96 = vmatprep.subr.bf16.mxu0 0
    %97 = vmatpush1.bf16.msra.mxu0 0
    %98 = vmatprep.subr.bf16.mxu0 0
    %99 = vmatpush1.bf16.msra.mxu0 0
    %100 = vmatprep.mubr.bf16.mxu0 0
    %101 = vmatmul.mubr.bf16.gmra.mrb[0].mxu0 %v53
    %v102 = vpop.f32.mrb[0].mxu0
    %v103 = vadd.f32 0.0, %v102
    %v104 = vpop.f32.mrb[0].mxu0
    %v105 = vpop.f32.mrb[0].mxu0
    %v106 = vadd.f32 0.0, %v105
    %v107 = vpop.f32.mrb[0].mxu0
    %108 = vmatprep.mubr.bf16.mxu0 0
    %109 = vmatmul.mubr.bf16.gmra.mrb[0].mxu0 %v56
    %v110 = vpop.f32.mrb[0].mxu0
    %v111 = vadd.f32 0.0, %v110
    %v112 = vpop.f32.mrb[0].mxu0
    %v113 = vpop.f32.mrb[0].mxu0
    %v114 = vadd.f32 0.0, %v113
    %v115 = vpop.f32.mrb[0].mxu0
    %116 = vmatprep.mubr.bf16.mxu0 0
    %117 = vmatmul.mubr.bf16.gmra.mrb[0].mxu0 %v59
    %v118 = vpop.f32.mrb[0].mxu0
    %v119 = vadd.f32 0.0, %v118
    %v120 = vpop.f32.mrb[0].mxu0
    %v121 = vpop.f32.mrb[0].mxu0
    %v122 = vadd.f32 0.0, %v121
    %v123 = vpop.f32.mrb[0].mxu0
    %124 = vmatprep.mubr.bf16.mxu0 0
    %125 = vmatmul.mubr.bf16.gmra.mrb[0].mxu0 %v62
    %v126 = vpop.f32.mrb[0].mxu0
    %v127 = vadd.f32 0.0, %v126
    %v128 = vpop.f32.mrb[0].mxu0
    %v129 = vpop.f32.mrb[0].mxu0
    %v130 = vadd.f32 0.0, %v129
    %v131 = vpop.f32.mrb[0].mxu0
    %132 = vdwg.mxu0
    %v133 = vld [vmem:[%s2] sm:$0xff]
    %v134 = vld [vmem:[%s2 + $0x8] sm:$0xff]
    %v135 = vadd.f32 %v103, %v133
    %v136 = vadd.f32 %v106, %v134
    %v137 = vadd.f32 %v111, %v133
    %v138 = vadd.f32 %v114, %v134
    %v139 = vadd.f32 %v119, %v133
    %v140 = vadd.f32 %v122, %v134
    %v141 = vadd.f32 %v127, %v133
    %v142 = vadd.f32 %v130, %v134
    %v143 = vpack.c.bf16 %v136, %v135
    %v144 = vpack.c.bf16 %v138, %v137
    %v145 = vpack.c.bf16 %v140, %v139
    %v146 = vpack.c.bf16 %v142, %v141
    %v151 = vunpack.c.l.b16 %v143
    %v152 = vunpack.c.h.b16 %v143
    %v153 = vunpack.c.l.b16 %v144
    %v154 = vunpack.c.h.b16 %v144
    %v155 = vunpack.c.l.b16 %v145
    %v156 = vunpack.c.h.b16 %v145
    %v157 = vunpack.c.l.b16 %v146
    %v158 = vunpack.c.h.b16 %v146
    %v159 = vpack.c.b16 %v151, %v151
    %v160 = vpack.c.b16 %v152, %v152
    %v161 = vpack.c.b16 %v153, %v153
    %v162 = vpack.c.b16 %v154, %v154
    %v163 = vpack.c.b16 %v155, %v155
    %v164 = vpack.c.b16 %v156, %v156
    %v165 = vpack.c.b16 %v157, %v157
    %v166 = vpack.c.b16 %v158, %v158
    %175 = vst [vmem:[#allocation2] sm:$0xf] %v159
    %176 = vst [vmem:[#allocation2 + $0x4] sm:$0xf] %v160
    %177 = vst [vmem:[#allocation2 + $0x8] sm:$0xf] %v161
    %178 = vst [vmem:[#allocation2 + $0xc] sm:$0xf] %v162
    %179 = vst [vmem:[#allocation2 + $0x10] sm:$0xf] %v163
    %180 = vst [vmem:[#allocation2 + $0x14] sm:$0xf] %v164
    %181 = vst [vmem:[#allocation2 + $0x18] sm:$0xf] %v165
    %182 = vst [vmem:[#allocation2 + $0x1c] sm:$0xf] %v166
    // Predicated region
    $region14: #{tpu_custom_call.1} parent=1 // pred_check
      _
    $region15: #{tpu_custom_call.1} parent=1 // pred_check_branch
      %184 = sbr.rel (0) target = $region17
    $region16: #{tpu_custom_call.1} parent=1 // pred_region
      %s186 = ssub.s32 512, 512
      %187 = vsyncadd [#allocation3], %s186
      %s188 = sshll.u32 [#allocation2], 4
      %s189 = int_to_ptr.vmem [resolvable:$true] %s188
      %194 = dma.vmem_to_hbm [thread:$0]  %s189, 512, %s3, [#allocation3], 64, 64, 4
    $region17: #{tpu_custom_call.1} parent=1 // pred_fallthru
      _
    // Predicated region
    $region18: #{tpu_custom_call.1} parent=1 // pred_check
      _
    $region19: #{tpu_custom_call.1} parent=1 // pred_check_branch
      %196 = sbr.rel (0) target = $region21
    $region20: #{tpu_custom_call.1} parent=1 // pred_region
      %197 = dma.done [#allocation3], 512
    $region21: #{tpu_custom_call.1} parent=1 // pred_fallthru
      _
    %198 = vsyncpa [#allocation3], 1

</llo_original>
